<compile_context>
chip_gen: v5e
topology: v5e:2x2
jax: 0.10.0
libtpu: 0.0.40
codegen_flags: <defaults>
</compile_context>

<pallas_src>
import jax
import jax.numpy as jnp
from jax.experimental import pallas as pl
from jax.experimental.pallas import tpu as pltpu


def _round_up(a: int, m: int) -> int:
    return (a + m - 1) // m * m


# --------------------------------------------------------------------------- #
# Kernels
# --------------------------------------------------------------------------- #
def _redux_mlp_kernel_inplace(x_ref, w_up_ref, b_up_ref, w_dn_ref, b_dn_ref,
                              o_ref):
    """f32 output: accumulate directly in the resident output block (no scratch)."""
    k = pl.program_id(1)

    @pl.when(k == 0)
    def _init():
        o_ref[...] = jnp.zeros_like(o_ref)

    # Up projection for this hidden chunk: (tb, redux) @ (redux, th) -> f32.
    h = jnp.dot(x_ref[...], w_up_ref[...], preferred_element_type=jnp.float32)
    h = h + b_up_ref[...]                      # bias in f32, broadcast (1, th)
    h = h * jax.nn.sigmoid(h)                  # SiLU in f32 (EUP)

    # Down projection chunk: (tb, th) @ (th, txt), f32 accumulation in o_ref.
    o_ref[...] += jnp.dot(h.astype(w_dn_ref.dtype), w_dn_ref[...],
                          preferred_element_type=jnp.float32)

    @pl.when(k == pl.num_programs(1) - 1)
    def _finalize():
        o_ref[...] += b_dn_ref[...]            # b_dn added exactly once


def _redux_mlp_kernel_acc(x_ref, w_up_ref, b_up_ref, w_dn_ref, b_dn_ref, o_ref,
                          acc_ref):
    """Narrow output dtype (e.g. bf16): f32 scratch accumulator, cast at the end."""
    k = pl.program_id(1)

    @pl.when(k == 0)
    def _init():
        acc_ref[...] = jnp.zeros_like(acc_ref)

    h = jnp.dot(x_ref[...], w_up_ref[...], preferred_element_type=jnp.float32)
    h = h + b_up_ref[...]
    h = h * jax.nn.sigmoid(h)
    acc_ref[...] += jnp.dot(h.astype(w_dn_ref.dtype), w_dn_ref[...],
                            preferred_element_type=jnp.float32)

    @pl.when(k == pl.num_programs(1) - 1)
    def _finalize():
        o_ref[...] = (acc_ref[...] + b_dn_ref[...]).astype(o_ref.dtype)


# --------------------------------------------------------------------------- #
# One-time (model-init) weight preprocessing
# --------------------------------------------------------------------------- #
def prepare_redux_weights(w_up_t, b_up, w_dn_t, b_dn, *,
                          weight_dtype=jnp.bfloat16):
    """Transpose / cast / pad the weights ONCE, outside the per-call path.

    Inputs are in PyTorch nn.Linear layout:
        w_up_t : (hidden, redux_dim)      b_up : (hidden,)
        w_dn_t : (txt,    hidden)         b_dn : (txt,)
    Returns kernel-layout parameters:
        w_up : (redux_dim, hidden_pad)  weight_dtype
        b_up : (1, hidden_pad)          float32
        w_dn : (hidden_pad, txt)        weight_dtype
        b_dn : (1, txt)                 float32
    The one-time hidden pad is exact: padded b_up/w_up columns are zero so
    silu(0)=0, and the matching zero rows of w_dn contribute nothing.
    """
    hidden, redux_dim = w_up_t.shape
    txt, hidden2 = w_dn_t.shape
    assert hidden == hidden2, "redux_up / redux_down hidden dims disagree"

    hidden_pad = _round_up(hidden, 128)

    w_up = jnp.transpose(jnp.asarray(w_up_t)).astype(weight_dtype)   # (redux, hidden)
    w_dn = jnp.transpose(jnp.asarray(w_dn_t)).astype(weight_dtype)   # (hidden, txt)
    b_up = jnp.asarray(b_up, jnp.float32).reshape(1, hidden)
    b_dn = jnp.asarray(b_dn, jnp.float32).reshape(1, txt)

    if hidden_pad != hidden:
        w_up = jnp.pad(w_up, ((0, 0), (0, hidden_pad - hidden)))
        b_up = jnp.pad(b_up, ((0, 0), (0, hidden_pad - hidden)))
        w_dn = jnp.pad(w_dn, ((0, hidden_pad - hidden), (0, 0)))

    return w_up, b_up, w_dn, b_dn


# --------------------------------------------------------------------------- #
# Generation-aware tile / VMEM configuration
# --------------------------------------------------------------------------- #
def _device_kind() -> str:
    try:
        return jax.devices()[0].device_kind.lower()
    except Exception:
        return ""


def _auto_tiles(B, hidden, tb, th):
    kind = _device_kind()
    is_v7 = "v7" in kind
    conservative = is_v7 or (kind == "")       # unknown device -> be careful with VMEM
    B8 = _round_up(max(B, 1), 8)

    if tb is None:
        if is_v7:
            # One tile per TensorCore (even 1:1 split), each tile capped ~512 rows.
            n_tiles = max(2, 2 * ((B8 + 2 * 512 - 1) // (2 * 512)))
        else:
            # v5e / v6e: as few batch tiles as possible -> weights read once.
            n_tiles = max(1, (B8 + 768 - 1) // 768)
        tb = (B8 + n_tiles - 1) // n_tiles
    tb = _round_up(max(8, min(tb, B8)), 8)

    if th is None:
        th = 1024 if conservative else 2048    # v7x: 64 MiB VMEM -> th <= 1024
    th = max(128, min((th // 128) * 128, hidden))
    while th > 128 and hidden % th != 0:       # th must divide hidden exactly
        th -= 128

    return tb, th, conservative


def _vmem_limit(tb, th, redux_dim, txt, wbytes, obytes, use_scratch, conservative):
    # Double-buffered inputs + output, plus the optional f32 accumulator.
    est = 2 * (tb * redux_dim * wbytes      # x tile
               + redux_dim * th * wbytes    # w_up chunk
               + th * 4                     # b_up chunk
               + th * txt * wbytes          # w_dn chunk
               + txt * 4                    # b_dn
               + tb * txt * obytes)         # output tile
    if use_scratch:
        est += tb * txt * 4
    cap = (48 << 20) if conservative else (100 << 20)
    return int(min(cap, max(32 << 20, int(est * 1.25) + (8 << 20))))


# --------------------------------------------------------------------------- #
# Forward wrapper
# --------------------------------------------------------------------------- #
def redux_image_encoder(x, w_up, b_up, w_dn, b_dn, *, tb=None, th=None,
                        vmem_limit_bytes=None, out_dtype=None):
    """x: (B, redux_dim) -> (B, txt_in_features).

    w_up/b_up/w_dn/b_dn must come from prepare_redux_weights (pre-transposed,
    pre-cast, hidden pre-padded) so the per-call path touches no weight bytes
    outside the kernel itself.
    """
    B, redux_dim = x.shape
    rd, hidden = w_up.shape
    hd, txt = w_dn.shape
    assert rd == redux_dim and hd == hidden, "weight shapes do not match x"
    assert hidden % 128 == 0, "use prepare_redux_weights (pads hidden to 128)"
    out_dtype = jnp.dtype(out_dtype) if out_dtype is not None else x.dtype

    tb, th, conservative = _auto_tiles(B, hidden, tb, th)
    assert hidden % th == 0, f"hidden chunk {th} must divide hidden {hidden}"

    # Batch padding only (tiny; exact: garbage rows are cropped after the call).
    B_pad = _round_up(B, tb)
    if B_pad != B:
        x = jnp.pad(x, ((0, B_pad - B), (0, 0)))
    x = x.astype(w_up.dtype)                   # bf16 (or f32) at the MXU input

    grid = (B_pad // tb, hidden // th)         # batch parallel, hidden reduction

    inplace = out_dtype == jnp.float32
    kernel = _redux_mlp_kernel_inplace if inplace else _redux_mlp_kernel_acc
    scratch = [] if inplace else [pltpu.VMEM((tb, txt), jnp.float32)]

    if vmem_limit_bytes is None:
        vmem_limit_bytes = _vmem_limit(
            tb, th, redux_dim, txt,
            wbytes=jnp.dtype(w_up.dtype).itemsize,
            obytes=out_dtype.itemsize,
            use_scratch=not inplace,
            conservative=conservative)

    out = pl.pallas_call(
        kernel,
        out_shape=jax.ShapeDtypeStruct((B_pad, txt), out_dtype),
        grid_spec=pltpu.PrefetchScalarGridSpec(
            num_scalar_prefetch=0,
            grid=grid,
            in_specs=[
                pl.BlockSpec((tb, redux_dim), lambda i, k: (i, 0)),   # x tile
                pl.BlockSpec((redux_dim, th), lambda i, k: (0, k)),   # w_up chunk
                pl.BlockSpec((1, th), lambda i, k: (0, k)),           # b_up chunk
                pl.BlockSpec((th, txt), lambda i, k: (k, 0)),         # w_dn chunk
                pl.BlockSpec((1, txt), lambda i, k: (0, 0)),          # b_dn
            ],
            out_specs=pl.BlockSpec((tb, txt), lambda i, k: (i, 0)),
            scratch_shapes=scratch,
        ),
        compiler_params=pltpu.CompilerParams(
            dimension_semantics=("parallel", "arbitrary"),
            vmem_limit_bytes=vmem_limit_bytes,
        ),
    )(x, w_up, b_up, w_dn, b_dn)

    return out[:B]


# --------------------------------------------------------------------------- #
# Reference (PyTorch layout) and self-test
# --------------------------------------------------------------------------- #
def reference(x, w_up_t, b_up, w_dn_t, b_dn):
    h = x @ w_up_t.T + b_up
    h = h * jax.nn.sigmoid(h)
    return h @ w_dn_t.T + b_dn


if __name__ == "__main__":
    # Small shapes consistent with the module (scaled down from 1152 / 4096).
    # B=10 deliberately not a multiple of the batch tile; hidden=384 with th=128
    # exercises the 3-step hidden reduction.
    B = 10
    redux_dim = 128
    txt_in_features = 128
    hidden = 3 * txt_in_features  # 384

    key = jax.random.PRNGKey(0)
    kx, k1, k2, k3, k4 = jax.random.split(key, 5)

    x = jax.random.normal(kx, (B, redux_dim), dtype=jnp.float32)

    # nn.Linear init (uniform in +-1/sqrt(fan_in)), PyTorch (out, in) layout.
    lim_up = 1.0 / (redux_dim ** 0.5)
    w_up_t = jax.random.uniform(k1, (hidden, redux_dim), dtype=jnp.float32,
                                minval=-lim_up, maxval=lim_up)
    b_up = jax.random.uniform(k2, (hidden,), dtype=jnp.float32,
                              minval=-lim_up, maxval=lim_up)
    lim_dn = 1.0 / (hidden ** 0.5)
    w_dn_t = jax.random.uniform(k3, (txt_in_features, hidden), dtype=jnp.float32,
                                minval=-lim_dn, maxval=lim_dn)
    b_dn = jax.random.uniform(k4, (txt_in_features,), dtype=jnp.float32,
                              minval=-lim_dn, maxval=lim_dn)

    ref = reference(x, w_up_t, b_up, w_dn_t, b_dn)

    # One-time weight preparation (the "model init" step).
    params_f32 = prepare_redux_weights(w_up_t, b_up, w_dn_t, b_dn,
                                       weight_dtype=jnp.float32)
    params_bf16 = prepare_redux_weights(w_up_t, b_up, w_dn_t, b_dn,
                                        weight_dtype=jnp.bfloat16)

    # 1) f32 path, explicit small tiles: exercises batch padding, 3-step hidden
    #    reduction and the in-place (scratch-free) accumulation kernel.
    out_f32 = redux_image_encoder(x, *params_f32, tb=8, th=128)
    out_f32 = jax.block_until_ready(out_f32)
    assert out_f32.shape == (B, txt_in_features)
    assert jnp.allclose(out_f32, ref, atol=1e-4, rtol=1e-4), "f32 mismatch"

    # 2) bf16 production path with generation-aware auto tiling (single batch
    #    tile on v5e/v6e, two tiles on v7x), f32 output accumulated in place.
    out_bf16 = redux_image_encoder(x, *params_bf16)
    out_bf16 = jax.block_until_ready(out_bf16)
    assert out_bf16.shape == (B, txt_in_features)
    assert jnp.allclose(out_bf16, ref, atol=5e-2, rtol=5e-2), "bf16 mismatch"

    # 3) bf16 output dtype: exercises the f32-scratch-accumulator kernel path.
    out_bf16o = redux_image_encoder(x, *params_bf16, tb=8, th=128,
                                    out_dtype=jnp.bfloat16)
    out_bf16o = jax.block_until_ready(out_bf16o)
    assert out_bf16o.dtype == jnp.bfloat16
    assert jnp.allclose(out_bf16o.astype(jnp.float32), ref,
                        atol=7e-2, rtol=7e-2), "bf16-output mismatch"

    print("KERNEL_OK")
</pallas_src>

<mosaic_0001>
module attributes {stable_mosaic.version = 11 : i64} {
  func.func @_redux_mlp_kernel_inplace(%arg0: i32, %arg1: i32, %arg2: memref<8x128xf32, #tpu.memory_space<vmem>>, %arg3: memref<128x128xf32, #tpu.memory_space<vmem>>, %arg4: memref<1x128xf32, #tpu.memory_space<vmem>>, %arg5: memref<128x128xf32, #tpu.memory_space<vmem>>, %arg6: memref<1x128xf32, #tpu.memory_space<vmem>>, %arg7: memref<8x128xf32, #tpu.memory_space<vmem>>) attributes {dimension_semantics = [#tpu.dimension_semantics<parallel>, #tpu.dimension_semantics<arbitrary>], iteration_bounds = array<i64: 2, 3>, scalar_prefetch = 0 : i64, scratch_operands = 0 : i64, tpu.core_type = #tpu.core_type<tc>, window_params = [{transform_indices = @transform_0, window_bounds = array<i64: 8, 128>}, {transform_indices = @transform_1, window_bounds = array<i64: 128, 128>}, {transform_indices = @transform_2, window_bounds = array<i64: 1, 128>}, {transform_indices = @transform_3, window_bounds = array<i64: 128, 128>}, {pipeline_mode = #tpu.pipeline_mode<synchronous>, transform_indices = @transform_4, window_bounds = array<i64: 1, 128>}, {transform_indices = @transform_5, window_bounds = array<i64: 8, 128>}]} {
    %c0_i32 = arith.constant 0 : i32
    %0 = arith.cmpi eq, %arg1, %c0_i32 : i32
    %1 = arith.extui %0 : i1 to i32
    %c0_i32_0 = arith.constant 0 : i32
    %2 = arith.cmpi ne, %1, %c0_i32_0 : i32
    scf.if %2 {
      %cst_15 = arith.constant 0.000000e+00 : f32
      %23 = vector.broadcast %cst_15 : f32 to vector<8x128xf32>
      %c0_16 = arith.constant 0 : index
      %c0_17 = arith.constant 0 : index
      %24 = vector.load %arg7[%c0_16, %c0_17] : memref<8x128xf32, #tpu.memory_space<vmem>>, vector<8x128xf32>
      tpu.vector_store %arg7[%c0_16, %c0_17], %23 {strides = array<i32>} : memref<8x128xf32, #tpu.memory_space<vmem>>, vector<8x128xf32>,
    } else {
    }
    %c0 = arith.constant 0 : index
    %c0_1 = arith.constant 0 : index
    %3 = vector.load %arg2[%c0, %c0_1] : memref<8x128xf32, #tpu.memory_space<vmem>>, vector<8x128xf32>
    %c0_2 = arith.constant 0 : index
    %c0_3 = arith.constant 0 : index
    %4 = vector.load %arg3[%c0_2, %c0_3] : memref<128x128xf32, #tpu.memory_space<vmem>>, vector<128x128xf32>
    %cst = arith.constant dense<0.000000e+00> : vector<8x128xf32>
    %5 = tpu.matmul %3, %4, %cst {dimension_numbers = #tpu.dot_dimension_numbers<[1], [0], [0], [1], [0, 0, 1, 1], [], []>} : vector<8x128xf32>, vector<128x128xf32>, vector<8x128xf32> -> vector<8x128xf32>
    %c0_4 = arith.constant 0 : index
    %c0_5 = arith.constant 0 : index
    %6 = vector.load %arg4[%c0_4, %c0_5] : memref<1x128xf32, #tpu.memory_space<vmem>>, vector<1x128xf32>
    %7 = vector.broadcast %6 : vector<1x128xf32> to vector<8x128xf32>
    %8 = arith.addf %5, %7 : vector<8x128xf32>
    %9 = arith.negf %8 : vector<8x128xf32>
    %10 = math.exp %9 : vector<8x128xf32>
    %cst_6 = arith.constant 1.000000e+00 : f32
    %11 = vector.broadcast %cst_6 : f32 to vector<8x128xf32>
    %12 = arith.addf %11, %10 : vector<8x128xf32>
    %13 = arith.divf %11, %12 : vector<8x128xf32>
    %14 = arith.mulf %8, %13 : vector<8x128xf32>
    %c0_7 = arith.constant 0 : index
    %c0_8 = arith.constant 0 : index
    %15 = vector.load %arg7[%c0_7, %c0_8] : memref<8x128xf32, #tpu.memory_space<vmem>>, vector<8x128xf32>
    %c0_9 = arith.constant 0 : index
    %c0_10 = arith.constant 0 : index
    %16 = vector.load %arg5[%c0_9, %c0_10] : memref<128x128xf32, #tpu.memory_space<vmem>>, vector<128x128xf32>
    %cst_11 = arith.constant dense<0.000000e+00> : vector<8x128xf32>
    %17 = tpu.matmul %14, %16, %cst_11 {dimension_numbers = #tpu.dot_dimension_numbers<[1], [0], [0], [1], [0, 0, 1, 1], [], []>} : vector<8x128xf32>, vector<128x128xf32>, vector<8x128xf32> -> vector<8x128xf32>
    %18 = arith.addf %15, %17 : vector<8x128xf32>
    %c0_12 = arith.constant 0 : index
    %c0_13 = arith.constant 0 : index
    %19 = vector.load %arg7[%c0_12, %c0_13] : memref<8x128xf32, #tpu.memory_space<vmem>>, vector<8x128xf32>
    tpu.vector_store %arg7[%c0_12, %c0_13], %18 {strides = array<i32>} : memref<8x128xf32, #tpu.memory_space<vmem>>, vector<8x128xf32>,
    %c2_i32 = arith.constant 2 : i32
    %20 = arith.cmpi eq, %arg1, %c2_i32 : i32
    %21 = arith.extui %20 : i1 to i32
    %c0_i32_14 = arith.constant 0 : i32
    %22 = arith.cmpi ne, %21, %c0_i32_14 : i32
    scf.if %22 {
      %c0_15 = arith.constant 0 : index
      %c0_16 = arith.constant 0 : index
      %23 = vector.load %arg7[%c0_15, %c0_16] : memref<8x128xf32, #tpu.memory_space<vmem>>, vector<8x128xf32>
      %c0_17 = arith.constant 0 : index
      %c0_18 = arith.constant 0 : index
      %24 = vector.load %arg6[%c0_17, %c0_18] : memref<1x128xf32, #tpu.memory_space<vmem>>, vector<1x128xf32>
      %25 = vector.broadcast %24 : vector<1x128xf32> to vector<8x128xf32>
      %26 = arith.addf %23, %25 : vector<8x128xf32>
      %c0_19 = arith.constant 0 : index
      %c0_20 = arith.constant 0 : index
      %27 = vector.load %arg7[%c0_19, %c0_20] : memref<8x128xf32, #tpu.memory_space<vmem>>, vector<8x128xf32>
      tpu.vector_store %arg7[%c0_19, %c0_20], %26 {strides = array<i32>} : memref<8x128xf32, #tpu.memory_space<vmem>>, vector<8x128xf32>,
    } else {
    }
    return
  }
  func.func @transform_0(%arg0: i32, %arg1: i32) -> (i32, i32) {
    %c0_i32 = arith.constant 0 : i32
    %c0_i32_0 = arith.constant 0 : i32
    return %arg0, %c0_i32 : i32, i32
  }
  func.func @transform_1(%arg0: i32, %arg1: i32) -> (i32, i32) {
    %c0_i32 = arith.constant 0 : i32
    %c0_i32_0 = arith.constant 0 : i32
    return %c0_i32, %arg1 : i32, i32
  }
  func.func @transform_2(%arg0: i32, %arg1: i32) -> (i32, i32) {
    %c0_i32 = arith.constant 0 : i32
    %c0_i32_0 = arith.constant 0 : i32
    return %c0_i32, %arg1 : i32, i32
  }
  func.func @transform_3(%arg0: i32, %arg1: i32) -> (i32, i32) {
    %c0_i32 = arith.constant 0 : i32
    %c0_i32_0 = arith.constant 0 : i32
    return %arg1, %c0_i32 : i32, i32
  }
  func.func @transform_4(%arg0: i32, %arg1: i32) -> (i32, i32) {
    %c0_i32 = arith.constant 0 : i32
    %c0_i32_0 = arith.constant 0 : i32
    %c0_i32_1 = arith.constant 0 : i32
    return %c0_i32, %c0_i32_0 : i32, i32
  }
  func.func @transform_5(%arg0: i32, %arg1: i32) -> (i32, i32) {
    %c0_i32 = arith.constant 0 : i32
    %c0_i32_0 = arith.constant 0 : i32
    return %arg0, %c0_i32 : i32, i32
  }
}

</mosaic_0001>

<llo_original>
// kernel: tpu_custom_call.1
$region0: #{tpu_custom_call.1}
  #allocation0 [shape = 'u32[]', space=smem, size = 0x4, offset = 0x4, fixed_abs, tag = 'smem constant byte address 0x4 - core index']
  #allocation1 [shape = 'u32[72,128]{1,0:T(1,128)}', space=vmem, size = 0x9000, scoped, tag = 'internal scratch']
  %s0 = inlined_call_operand.hbm [shape: f32[16,128], index: 0, kind: input, shape index: {}]
  %s1 = inlined_call_operand.hbm [shape: f32[128,384], index: 1, kind: input, shape index: {}]
  %s2 = inlined_call_operand.hbm [shape: f32[1,384], index: 2, kind: input, shape index: {}]
  %s3 = inlined_call_operand.hbm [shape: f32[384,128], index: 3, kind: input, shape index: {}]
  %s4 = inlined_call_operand.vmem [shape: f32[1,128], index: 4, kind: input, shape index: {}]
  %s5 = inlined_call_operand.hbm [shape: f32[16,128], index: 5, kind: output, shape index: {}]
  %s6 = sld [smem:[#allocation0]]
  $region77: #{tpu_custom_call.1} parent=0
    _
  %s8 = ssub.s32 1, %s6
  %s9 = scalar_select 0, %s8, %s6
  $region1: #{tpu_custom_call.1} parent=0
    #allocation2 [shape = 'u8[8192]{0}', space=vmem, size = 0x2000, scoped, tag = 'input window, operand 0']
    #allocation3 [shape = 's32[2]{0}', space=sflag, size = 0x8, scoped, tag = 'scoped memory for tpu_custom_call.1']
    #allocation4 [shape = 's32[2]{0}', space=sflag, size = 0x8, scoped, tag = 'scoped memory for tpu_custom_call.1']
    #allocation5 [shape = 'u8[131072]{0}', space=vmem, size = 0x20000, scoped, tag = 'input window, operand 1']
    #allocation6 [shape = 's32[2]{0}', space=sflag, size = 0x8, scoped, tag = 'scoped memory for tpu_custom_call.1']
    #allocation7 [shape = 'u8[1024]{0}', space=vmem, size = 0x400, scoped, tag = 'input window, operand 2']
    #allocation8 [shape = 'u8[131072]{0}', space=vmem, size = 0x20000, scoped, tag = 'input window, operand 3']
    #allocation9 [shape = 's32[2]{0}', space=sflag, size = 0x8, scoped, tag = 'scoped memory for tpu_custom_call.1']
    #allocation10 [shape = 'u8[8192]{0}', space=vmem, size = 0x2000, scoped, tag = 'output window, operand 0']
    %10 = vsyncpa [#allocation3], 0
    %s11 = scalar_lea.sflag [#allocation3], 1
    %12 = vsyncpa %s11, 0
    %13 = vsyncpa [#allocation6], 0
    %s14 = scalar_lea.sflag [#allocation6], 1
    %15 = vsyncpa %s14, 0
    %16 = vsyncpa [#allocation9], 0
    %s17 = scalar_lea.sflag [#allocation9], 1
    %18 = vsyncpa %s17, 0
    %19 = vsyncpa [#allocation4], 0
    %s20 = scalar_lea.sflag [#allocation4], 1
    %21 = vsyncpa %s20, 0
    loop: start=0, step=1, limit=8
    $region2: #{tpu_custom_call.1} parent=1 // loop_pre_header
      _
    $region3: #{tpu_custom_call.1} parent=1 // loop_header
      %s23 = sphi 0, %s27
      %p24 = scmp.ge.s32.totalorder %s23, 8
      %s30 = sphi 0, %s42
      %s31 = sphi 0, %s38
      %s32 = sphi 0, %s30
      %s33 = sphi 0, %s31
      %s34 = sphi 0, %s32
      %s35 = sphi 0, %s33
      %s45 = sphi 0, %s47
      %s48 = sphi 0, %s45
      %s49 = sphi 0, %s48
      %s65 = sphi 0, %s49
      %s71 = sphi 0, %s73
      %s74 = sphi 0, %s71
      %s75 = sphi 0, %s74
      %s91 = sphi 0, %s75
      %s97 = sphi 0, %s99
      %s100 = sphi 0, %s97
      %s101 = sphi 0, %s100
      %s117 = sphi 0, %s101
      %s123 = sphi 0, %s125
      %s126 = sphi 0, %s123
      %s127 = sphi 0, %s126
      %s143 = sphi 0, %s127
      %s147 = sphi 0, %s147
      %s149 = sphi 0, %s147
      %s150 = sphi 0, %s149
      %s164 = sphi 0, %s150
      %s170 = sphi 0, %s172
      %s173 = sphi 0, %s170
      %s174 = sphi 0, %s173
      %s190 = sphi 0, %s174
    $region4: #{tpu_custom_call.1} parent=1 // loop_header_branch
      %26 = sbr.rel (%p24) target = $region8
    $region5: #{tpu_custom_call.1} parent=1 // loop_body
      %s28 = ssub.s32 %s23, 1
      %s29 = ssub.s32 %s23, 2
      %s36 = sadd.s32 1, %s31
      %p37 = scmp.ge.s32.totalorder %s36, 3
      %s38 = scalar_select %p37, 0, %s36
      %s39 = sadd.s32 1, %s30
      %s40 = scalar_select %p37, %s39, %s30
      %p41 = scmp.ge.s32.totalorder %s40, 2
      %s42 = scalar_select %p41, 0, %s40
      %s43 = ssub.s32 %s30, %s42
      %p44 = scmp.eq.s32.totalorder %s43, 0
      %s46 = sadd.s32 %s45, 1
      %s47 = scalar_select %p44, %s45, %s46
      %p50 = pneg %p44
      %p51 = scmp.eq.s32.totalorder %s23, 5
      %p52 = por %p50, %p51
      %p53 = scmp.ne.s32.totalorder %s45, %s48
      %p54 = scmp.eq.s32.totalorder %s23, 0
      %p55 = por %p53, %p54
      %p56 = scmp.ne.s32.totalorder %s45, %s48
      %p57 = scmp.eq.s32.totalorder %s28, 5
      %p58 = por %p56, %p57
      %p59 = scmp.ne.s32.totalorder %s48, %s49
      %p60 = scmp.eq.s32.totalorder %s28, 0
      %p61 = por %p59, %p60
      %p62 = scmp.ne.s32.totalorder %s48, %s49
      %p63 = scmp.eq.s32.totalorder %s29, 5
      %p64 = por %p62, %p63
      %p66 = scmp.ne.s32.totalorder %s49, %s65
      %p67 = scmp.eq.s32.totalorder %s29, 0
      %p68 = por %p66, %p67
      %s69 = ssub.s32 %s31, %s38
      %p70 = scmp.eq.s32.totalorder %s69, 0
      %s72 = sadd.s32 %s71, 1
      %s73 = scalar_select %p70, %s71, %s72
      %p76 = pneg %p70
      %p77 = scmp.eq.s32.totalorder %s23, 5
      %p78 = por %p76, %p77
      %p79 = scmp.ne.s32.totalorder %s71, %s74
      %p80 = scmp.eq.s32.totalorder %s23, 0
      %p81 = por %p79, %p80
      %p82 = scmp.ne.s32.totalorder %s71, %s74
      %p83 = scmp.eq.s32.totalorder %s28, 5
      %p84 = por %p82, %p83
      %p85 = scmp.ne.s32.totalorder %s74, %s75
      %p86 = scmp.eq.s32.totalorder %s28, 0
      %p87 = por %p85, %p86
      %p88 = scmp.ne.s32.totalorder %s74, %s75
      %p89 = scmp.eq.s32.totalorder %s29, 5
      %p90 = por %p88, %p89
      %p92 = scmp.ne.s32.totalorder %s75, %s91
      %p93 = scmp.eq.s32.totalorder %s29, 0
      %p94 = por %p92, %p93
      %s95 = ssub.s32 %s31, %s38
      %p96 = scmp.eq.s32.totalorder %s95, 0
      %s98 = sadd.s32 %s97, 1
      %s99 = scalar_select %p96, %s97, %s98
      %p102 = pneg %p96
      %p103 = scmp.eq.s32.totalorder %s23, 5
      %p104 = por %p102, %p103
      %p105 = scmp.ne.s32.totalorder %s97, %s100
      %p106 = scmp.eq.s32.totalorder %s23, 0
      %p107 = por %p105, %p106
      %p108 = scmp.ne.s32.totalorder %s97, %s100
      %p109 = scmp.eq.s32.totalorder %s28, 5
      %p110 = por %p108, %p109
      %p111 = scmp.ne.s32.totalorder %s100, %s101
      %p112 = scmp.eq.s32.totalorder %s28, 0
      %p113 = por %p111, %p112
      %p114 = scmp.ne.s32.totalorder %s100, %s101
      %p115 = scmp.eq.s32.totalorder %s29, 5
      %p116 = por %p114, %p115
      %p118 = scmp.ne.s32.totalorder %s101, %s117
      %p119 = scmp.eq.s32.totalorder %s29, 0
      %p120 = por %p118, %p119
      %s121 = ssub.s32 %s31, %s38
      %p122 = scmp.eq.s32.totalorder %s121, 0
      %s124 = sadd.s32 %s123, 1
      %s125 = scalar_select %p122, %s123, %s124
      %p128 = pneg %p122
      %p129 = scmp.eq.s32.totalorder %s23, 5
      %p130 = por %p128, %p129
      %p131 = scmp.ne.s32.totalorder %s123, %s126
      %p132 = scmp.eq.s32.totalorder %s23, 0
      %p133 = por %p131, %p132
      %p134 = scmp.ne.s32.totalorder %s123, %s126
      %p135 = scmp.eq.s32.totalorder %s28, 5
      %p136 = por %p134, %p135
      %p137 = scmp.ne.s32.totalorder %s126, %s127
      %p138 = scmp.eq.s32.totalorder %s28, 0
      %p139 = por %p137, %p138
      %p140 = scmp.ne.s32.totalorder %s126, %s127
      %p141 = scmp.eq.s32.totalorder %s29, 5
      %p142 = por %p140, %p141
      %p144 = scmp.ne.s32.totalorder %s127, %s143
      %p145 = scmp.eq.s32.totalorder %s29, 0
      %p146 = por %p144, %p145
      %s148 = sadd.s32 %s147, 1
      %p151 = scmp.eq.s32.totalorder %s23, 5
      %p152 = scmp.ne.s32.totalorder %s147, %s149
      %p153 = scmp.eq.s32.totalorder %s23, 0
      %p154 = por %p152, %p153
      %p155 = scmp.ne.s32.totalorder %s147, %s149
      %p156 = scmp.eq.s32.totalorder %s28, 5
      %p157 = por %p155, %p156
      %p158 = scmp.ne.s32.totalorder %s149, %s150
      %p159 = scmp.eq.s32.totalorder %s28, 0
      %p160 = por %p158, %p159
      %p161 = scmp.ne.s32.totalorder %s149, %s150
      %p162 = scmp.eq.s32.totalorder %s29, 5
      %p163 = por %p161, %p162
      %p165 = scmp.ne.s32.totalorder %s150, %s164
      %p166 = scmp.eq.s32.totalorder %s29, 0
      %p167 = por %p165, %p166
      %s168 = ssub.s32 %s30, %s42
      %p169 = scmp.eq.s32.totalorder %s168, 0
      %s171 = sadd.s32 %s170, 1
      %s172 = scalar_select %p169, %s170, %s171
      %p175 = pneg %p169
      %p176 = scmp.eq.s32.totalorder %s23, 5
      %p177 = por %p175, %p176
      %p178 = scmp.ne.s32.totalorder %s170, %s173
      %p179 = scmp.eq.s32.totalorder %s23, 0
      %p180 = por %p178, %p179
      %p181 = scmp.ne.s32.totalorder %s170, %s173
      %p182 = scmp.eq.s32.totalorder %s28, 5
      %p183 = por %p181, %p182
      %p184 = scmp.ne.s32.totalorder %s173, %s174
      %p185 = scmp.eq.s32.totalorder %s28, 0
      %p186 = por %p184, %p185
      %p187 = scmp.ne.s32.totalorder %s173, %s174
      %p188 = scmp.eq.s32.totalorder %s29, 5
      %p189 = por %p187, %p188
      %p191 = scmp.ne.s32.totalorder %s174, %s190
      %p192 = scmp.eq.s32.totalorder %s29, 0
      %p193 = por %p191, %p192
      %p194 = scmp.le.s32.totalorder 1, %s23
      %p195 = scmp.lt.s32.totalorder %s23, 7
      %p196 = pnand %p194, %p195
      %p197 = pneg %p196
      // Predicated region
      $region9: #{tpu_custom_call.1} parent=5 // pred_check
        _
      $region10: #{tpu_custom_call.1} parent=5 // pred_check_branch
        %199 = sbr.rel (%p196) target = $region12
      $region11: #{tpu_custom_call.1} parent=5 // pred_region
        %s200 = ssub.s32 %s23, 1
        // Predicated region
        $region13: #{tpu_custom_call.1} parent=11 // pred_check
          %p201 = pneg %p160
        $region14: #{tpu_custom_call.1} parent=11 // pred_check_branch
          %203 = sbr.rel (%p201) target = $region16
        $region15: #{tpu_custom_call.1} parent=11 // pred_region
          _
        $region16: #{tpu_custom_call.1} parent=11 // pred_fallthru
          _
      $region12: #{tpu_custom_call.1} parent=5 // pred_fallthru
        _
      %p204 = scmp.lt.s32.totalorder %s23, 6
      // Predicated region
      $region17: #{tpu_custom_call.1} parent=5 // pred_check
        %p205 = pneg %p204
      $region18: #{tpu_custom_call.1} parent=5 // pred_check_branch
        %207 = sbr.rel (%p205) target = $region20
      $region19: #{tpu_custom_call.1} parent=5 // pred_region
        // Predicated region
        $region21: #{tpu_custom_call.1} parent=19 // pred_check
          %p208 = pneg %p55
        $region22: #{tpu_custom_call.1} parent=19 // pred_check_branch
          %210 = sbr.rel (%p208) target = $region24
        $region23: #{tpu_custom_call.1} parent=19 // pred_region
          %s211 = sand.u32 %s45, 1
          %s212 = scalar_lea.sflag [#allocation3], %s211
          %s213 = sand.u32 %s45, 1
          %s214 = smul.addr %s213, 8
          %s215 = scalar_lea.vmem [#allocation2], %s214
          %217 = vsyncadd %s212, 0
          %s218 = smul.addr %s30, 8
          %s219 = scalar_lea.hbm %s0, %s218
          %s221 = sshll.u32 %s219, 4
          %s222 = int_to_ptr.hbm [resolvable:$true] %s221
          %s223 = sshll.u32 %s215, 4
          %s224 = int_to_ptr.vmem [resolvable:$true] %s223
          %226 = dma.hbm_to_vmem [thread:$0]  %s222, 128, %s224, %s212
        $region24: #{tpu_custom_call.1} parent=19 // pred_fallthru
          _
        // Predicated region
        $region25: #{tpu_custom_call.1} parent=19 // pred_check
          %p227 = pneg %p81
        $region26: #{tpu_custom_call.1} parent=19 // pred_check_branch
          %229 = sbr.rel (%p227) target = $region28
        $region27: #{tpu_custom_call.1} parent=19 // pred_region
          %s230 = sand.u32 %s23, 1
          %s231 = scalar_lea.sflag [#allocation6], %s230
          %s232 = sand.u32 %s71, 1
          %s233 = smul.addr %s232, 128
          %s234 = scalar_lea.vmem [#allocation5], %s233
          %236 = vsyncadd %s231, 0
          %s237 = smul.addr %s31, 8
          %s238 = scalar_lea.hbm %s1, %s237
          %s239 = sshll.u32 %s238, 4
          %s240 = int_to_ptr.hbm [resolvable:$true] %s239
          %s241 = sshll.u32 %s234, 4
          %s242 = int_to_ptr.vmem [resolvable:$true] %s241
          %247 = dma.hbm_to_vmem [thread:$0]  %s240, 2048, %s242, %s231, 384, 128, 8
        $region28: #{tpu_custom_call.1} parent=19 // pred_fallthru
          _
        // Predicated region
        $region29: #{tpu_custom_call.1} parent=19 // pred_check
          %p248 = pneg %p107
        $region30: #{tpu_custom_call.1} parent=19 // pred_check_branch
          %250 = sbr.rel (%p248) target = $region32
        $region31: #{tpu_custom_call.1} parent=19 // pred_region
          %s251 = sand.u32 %s23, 1
          %s252 = scalar_lea.sflag [#allocation6], %s251
          %s253 = sand.u32 %s97, 1
          %s254 = scalar_lea.vmem [#allocation7], %s253
          %256 = vsyncadd %s252, 0
          %s257 = scalar_lea.hbm %s2, %s31
          %s259 = sshll.u32 %s257, 4
          %s260 = int_to_ptr.hbm [resolvable:$true] %s259
          %s261 = sshll.u32 %s254, 4
          %s262 = int_to_ptr.vmem [resolvable:$true] %s261
          %264 = dma.hbm_to_vmem [thread:$0]  %s260, 16, %s262, %s252
        $region32: #{tpu_custom_call.1} parent=19 // pred_fallthru
          _
        // Predicated region
        $region33: #{tpu_custom_call.1} parent=19 // pred_check
          %p265 = pneg %p133
        $region34: #{tpu_custom_call.1} parent=19 // pred_check_branch
          %267 = sbr.rel (%p265) target = $region36
        $region35: #{tpu_custom_call.1} parent=19 // pred_region
          %s268 = sand.u32 %s123, 1
          %s269 = scalar_lea.sflag [#allocation9], %s268
          %s270 = sand.u32 %s123, 1
          %s271 = smul.addr %s270, 128
          %s272 = scalar_lea.vmem [#allocation8], %s271
          %s273 = smul.u32 16, %s31
          %275 = vsyncadd %s269, 0
          %s276 = smul.addr %s273, 8
          %s277 = scalar_lea.hbm %s3, %s276
          %s278 = sshll.u32 %s277, 4
          %s279 = int_to_ptr.hbm [resolvable:$true] %s278
          %s280 = sshll.u32 %s272, 4
          %s281 = int_to_ptr.vmem [resolvable:$true] %s280
          %286 = dma.hbm_to_vmem [thread:$0]  %s279, 2048, %s281, %s269, 128, 128, 8
        $region36: #{tpu_custom_call.1} parent=19 // pred_fallthru
          _
      $region20: #{tpu_custom_call.1} parent=5 // pred_fallthru
        _
      %p287 = scmp.le.s32.totalorder 1, %s23
      %p288 = scmp.lt.s32.totalorder %s23, 7
      %p289 = pnand %p287, %p288
      %p290 = pneg %p289
      // Predicated region
      $region37: #{tpu_custom_call.1} parent=5 // pred_check
        _
      $region38: #{tpu_custom_call.1} parent=5 // pred_check_branch
        %292 = sbr.rel (%p289) target = $region40
      $region39: #{tpu_custom_call.1} parent=5 // pred_region
        %s293 = ssub.s32 %s23, 1
        %s294 = sand.u32 %s48, 1
        %s295 = scalar_lea.sflag [#allocation3], %s294
        %s296 = sand.u32 %s48, 1
        %s297 = smul.addr %s296, 8
        %s298 = scalar_lea.vmem [#allocation2], %s297
        // Predicated region
        $region41: #{tpu_custom_call.1} parent=39 // pred_check
          %p299 = pneg %p61
        $region42: #{tpu_custom_call.1} parent=39 // pred_check_branch
          %301 = sbr.rel (%p299) target = $region44
        $region43: #{tpu_custom_call.1} parent=39 // pred_region
          %303 = dma.done %s295, 128
        $region44: #{tpu_custom_call.1} parent=39 // pred_fallthru
          _
        %s304 = sand.u32 %s28, 1
        %s305 = scalar_lea.sflag [#allocation6], %s304
        %s306 = sand.u32 %s74, 1
        %s307 = smul.addr %s306, 128
        %s308 = scalar_lea.vmem [#allocation5], %s307
        // Predicated region
        $region45: #{tpu_custom_call.1} parent=39 // pred_check
          %p309 = pneg %p87
        $region46: #{tpu_custom_call.1} parent=39 // pred_check_branch
          %311 = sbr.rel (%p309) target = $region48
        $region47: #{tpu_custom_call.1} parent=39 // pred_region
          %313 = dma.done %s305, 2048
        $region48: #{tpu_custom_call.1} parent=39 // pred_fallthru
          _
        %s314 = sand.u32 %s28, 1
        %s315 = scalar_lea.sflag [#allocation6], %s314
        %s316 = sand.u32 %s100, 1
        %s317 = scalar_lea.vmem [#allocation7], %s316
        // Predicated region
        $region49: #{tpu_custom_call.1} parent=39 // pred_check
          %p318 = pneg %p113
        $region50: #{tpu_custom_call.1} parent=39 // pred_check_branch
          %320 = sbr.rel (%p318) target = $region52
        $region51: #{tpu_custom_call.1} parent=39 // pred_region
          %322 = dma.done %s315, 16
        $region52: #{tpu_custom_call.1} parent=39 // pred_fallthru
          _
        %s323 = sand.u32 %s126, 1
        %s324 = scalar_lea.sflag [#allocation9], %s323
        %s325 = sand.u32 %s126, 1
        %s326 = smul.addr %s325, 128
        %s327 = scalar_lea.vmem [#allocation8], %s326
        // Predicated region
        $region53: #{tpu_custom_call.1} parent=39 // pred_check
          %p328 = pneg %p139
        $region54: #{tpu_custom_call.1} parent=39 // pred_check_branch
          %330 = sbr.rel (%p328) target = $region56
        $region55: #{tpu_custom_call.1} parent=39 // pred_region
          %332 = dma.done %s324, 2048
        $region56: #{tpu_custom_call.1} parent=39 // pred_fallthru
          _
        %s333 = sand.u32 %s48, 1
        %s334 = scalar_lea.sflag [#allocation3], %s333
        %s335 = sand.u32 %s48, 1
        %s336 = smul.addr %s335, 8
        %s337 = scalar_lea.vmem [#allocation2], %s336
        %p338 = pneg %p61
        %p339 = pneg %p58
        %s340 = sand.u32 %s28, 1
        %s341 = scalar_lea.sflag [#allocation6], %s340
        %s342 = sand.u32 %s74, 1
        %s343 = smul.addr %s342, 128
        %s344 = scalar_lea.vmem [#allocation5], %s343
        %p345 = pneg %p87
        %p346 = pneg %p84
        %s347 = sand.u32 %s28, 1
        %s348 = scalar_lea.sflag [#allocation6], %s347
        %s349 = sand.u32 %s100, 1
        %s350 = scalar_lea.vmem [#allocation7], %s349
        %p351 = pneg %p113
        %p352 = pneg %p110
        %s353 = sand.u32 %s126, 1
        %s354 = scalar_lea.sflag [#allocation9], %s353
        %s355 = sand.u32 %s126, 1
        %s356 = smul.addr %s355, 128
        %s357 = scalar_lea.vmem [#allocation8], %s356
        %p358 = pneg %p139
        %p359 = pneg %p136
        %p360 = pneg %p160
        %p361 = pneg %p157
        %p362 = pneg %p186
        %p363 = pneg %p183
        %s364 = sand.u32 %s173, 1
        %s365 = scalar_lea.sflag [#allocation4], %s364
        %s366 = sand.u32 %s173, 1
        %s367 = smul.addr %s366, 8
        %s368 = scalar_lea.vmem [#allocation10], %s367
        %s369 = smul.u32 16, %s33
        %p370 = scmp.eq.s32.totalorder %s33, 0
        // Predicated region
        $region57: #{tpu_custom_call.1} parent=39 // pred_check
          %p371 = pneg %p370
        $region58: #{tpu_custom_call.1} parent=39 // pred_check_branch
          %373 = sbr.rel (%p371) target = $region60
        $region59: #{tpu_custom_call.1} parent=39 // pred_region
          %374 = vst [vmem:[%s368] sm:$0xff] 0.0
        $region60: #{tpu_custom_call.1} parent=39 // pred_fallthru
          _
        %v375 = vld [vmem:[%s298] sm:$0xff]
        %v376 = vld [vmem:[%s308] sm:$0xff]
        %v377 = vld [vmem:[%s308 + $0x8] sm:$0xff]
        %v378 = vld [vmem:[%s308 + $0x10] sm:$0xff]
        %v379 = vld [vmem:[%s308 + $0x18] sm:$0xff]
        %v380 = vld [vmem:[%s308 + $0x20] sm:$0xff]
        %v381 = vld [vmem:[%s308 + $0x28] sm:$0xff]
        %v382 = vld [vmem:[%s308 + $0x30] sm:$0xff]
        %v383 = vld [vmem:[%s308 + $0x38] sm:$0xff]
        %v384 = vld [vmem:[%s308 + $0x40] sm:$0xff]
        %v385 = vld [vmem:[%s308 + $0x48] sm:$0xff]
        %v386 = vld [vmem:[%s308 + $0x50] sm:$0xff]
        %v387 = vld [vmem:[%s308 + $0x58] sm:$0xff]
        %v388 = vld [vmem:[%s308 + $0x60] sm:$0xff]
        %v389 = vld [vmem:[%s308 + $0x68] sm:$0xff]
        %v390 = vld [vmem:[%s308 + $0x70] sm:$0xff]
        %v391 = vld [vmem:[%s308 + $0x78] sm:$0xff]
        %v392 = vld [vmem:[%s317] sm:$0x1]
        %v394 = vperm.slane %v392, 0
        %396 = vmatpush.msra.mxu0 %v391
        %397 = vmatpush.msra.mxu0 %v390
        %398 = vmatpush.msra.mxu0 %v389
        %399 = vmatpush.msra.mxu0 %v388
        %400 = vmatpush.msra.mxu0 %v387
        %401 = vmatpush.msra.mxu0 %v386
        %402 = vmatpush.msra.mxu0 %v385
        %403 = vmatpush.msra.mxu0 %v384
        %404 = vmatpush.msra.mxu0 %v383
        %405 = vmatpush.msra.mxu0 %v382
        %406 = vmatpush.msra.mxu0 %v381
        %407 = vmatpush.msra.mxu0 %v380
        %408 = vmatpush.msra.mxu0 %v379
        %409 = vmatpush.msra.mxu0 %v378
        %410 = vmatpush.msra.mxu0 %v377
        %411 = vmatpush.msra.mxu0 %v376
        %412 = vmatmul.f32.gmra.mxu0 %v375
        %v413 = vpop.f32.mrf.mxu0
        %v414 = vadd.f32 %v394, %v413
        %415 = vdwg.mxu0
        %v416 = vxor.u32 %v414, 2147483648
        %v417 = vmul.f32 %v416, 1.442695
        %v418 = vpow.pop %v417
        %v419 = vadd.f32 %v418, 1.0
        %v420 = vrcp.pop %v419
        %v421 = vmul.f32 %v419, %v420
        %v422 = vsub.f32 1.0, %v421
        %v423 = vmul.f32 %v420, %v422
        %v424 = vadd.f32 %v420, %v423
        %vm425 = vweird.f32 %v419
        %vm426 = vweird.f32 %v420
        %vm427 = vmor %vm425, %vm426
        %v428 = vsel %vm427, %v420, %v424
        %v429 = vand.u32 2147483647, %v419
        %vm430 = vcmp.eq.f32.partialorder %v429, 8.507059e+37
        %v431 = vand.u32 %v419, 2147483648
        %v432 = vor.u32 1.1754944e-38, %v431
        %v433 = vsel %vm430, %v432, %v428
        %v434 = vmul.f32 1.0, %v433
        %v435 = vmul.f32 %v414, %v434
        %v436 = vld [vmem:[%s368] sm:$0xff]
        %v437 = vld [vmem:[%s327] sm:$0xff]
        %v438 = vld [vmem:[%s327 + $0x8] sm:$0xff]
        %v439 = vld [vmem:[%s327 + $0x10] sm:$0xff]
        %v440 = vld [vmem:[%s327 + $0x18] sm:$0xff]
        %v441 = vld [vmem:[%s327 + $0x20] sm:$0xff]
        %v442 = vld [vmem:[%s327 + $0x28] sm:$0xff]
        %v443 = vld [vmem:[%s327 + $0x30] sm:$0xff]
        %v444 = vld [vmem:[%s327 + $0x38] sm:$0xff]
        %v445 = vld [vmem:[%s327 + $0x40] sm:$0xff]
        %v446 = vld [vmem:[%s327 + $0x48] sm:$0xff]
        %v447 = vld [vmem:[%s327 + $0x50] sm:$0xff]
        %v448 = vld [vmem:[%s327 + $0x58] sm:$0xff]
        %v449 = vld [vmem:[%s327 + $0x60] sm:$0xff]
        %v450 = vld [vmem:[%s327 + $0x68] sm:$0xff]
        %v451 = vld [vmem:[%s327 + $0x70] sm:$0xff]
        %v452 = vld [vmem:[%s327 + $0x78] sm:$0xff]
        %453 = vmatpush.msra.mxu0 %v452
        %454 = vmatpush.msra.mxu0 %v451
        %455 = vmatpush.msra.mxu0 %v450
        %456 = vmatpush.msra.mxu0 %v449
        %457 = vmatpush.msra.mxu0 %v448
        %458 = vmatpush.msra.mxu0 %v447
        %459 = vmatpush.msra.mxu0 %v446
        %460 = vmatpush.msra.mxu0 %v445
        %461 = vmatpush.msra.mxu0 %v444
        %462 = vmatpush.msra.mxu0 %v443
        %463 = vmatpush.msra.mxu0 %v442
        %464 = vmatpush.msra.mxu0 %v441
        %465 = vmatpush.msra.mxu0 %v440
        %466 = vmatpush.msra.mxu0 %v439
        %467 = vmatpush.msra.mxu0 %v438
        %468 = vmatpush.msra.mxu0 %v437
        %469 = vmatmul.f32.gmra.mxu0 %v435
        %v470 = vpop.f32.mrf.mxu0
        %v471 = vadd.f32 0.0, %v470
        %472 = vdwg.mxu0
        %v473 = vadd.f32 %v436, %v471
        %474 = vst [vmem:[%s368] sm:$0xff] %v473
        %p475 = scmp.eq.s32.totalorder %s33, 2
        // Predicated region
        $region61: #{tpu_custom_call.1} parent=39 // pred_check
          %p476 = pneg %p475
        $region62: #{tpu_custom_call.1} parent=39 // pred_check_branch
          %478 = sbr.rel (%p476) target = $region64
        $region63: #{tpu_custom_call.1} parent=39 // pred_region
          %v479 = vld [vmem:[%s368] sm:$0xff]
          %v480 = vld [vmem:[%s4] sm:$0x1]
          %v482 = vperm.slane %v480, 0
          %v484 = vadd.f32 %v479, %v482
          %485 = vst [vmem:[%s368] sm:$0xff] %v484
        $region64: #{tpu_custom_call.1} parent=39 // pred_fallthru
          _
        %s486 = sand.u32 %s173, 1
        %s487 = scalar_lea.sflag [#allocation4], %s486
        %s488 = sand.u32 %s173, 1
        %s489 = smul.addr %s488, 8
        %s490 = scalar_lea.vmem [#allocation10], %s489
        // Predicated region
        $region65: #{tpu_custom_call.1} parent=39 // pred_check
          %p491 = pneg %p183
        $region66: #{tpu_custom_call.1} parent=39 // pred_check_branch
          %493 = sbr.rel (%p491) target = $region68
        $region67: #{tpu_custom_call.1} parent=39 // pred_region
          %495 = vsyncadd %s487, 0
          %s496 = smul.addr %s32, 8
          %s497 = scalar_lea.hbm %s5, %s496
          %s499 = sshll.u32 %s490, 4
          %s500 = int_to_ptr.vmem [resolvable:$true] %s499
          %s501 = sshll.u32 %s497, 4
          %s502 = int_to_ptr.hbm [resolvable:$true] %s501
          %504 = dma.vmem_to_hbm [thread:$0]  %s500, 128, %s502, %s487
        $region68: #{tpu_custom_call.1} parent=39 // pred_fallthru
          _
      $region40: #{tpu_custom_call.1} parent=5 // pred_fallthru
        _
      %p505 = scmp.le.s32.totalorder 2, %s23
      // Predicated region
      $region69: #{tpu_custom_call.1} parent=5 // pred_check
        %p506 = pneg %p505
      $region70: #{tpu_custom_call.1} parent=5 // pred_check_branch
        %508 = sbr.rel (%p506) target = $region72
      $region71: #{tpu_custom_call.1} parent=5 // pred_region
        %s509 = ssub.s32 %s23, 2
        // Predicated region
        $region73: #{tpu_custom_call.1} parent=71 // pred_check
          %p510 = pneg %p189
        $region74: #{tpu_custom_call.1} parent=71 // pred_check_branch
          %512 = sbr.rel (%p510) target = $region76
        $region75: #{tpu_custom_call.1} parent=71 // pred_region
          %s513 = sand.u32 %s174, 1
          %s514 = scalar_lea.sflag [#allocation4], %s513
          %s515 = sand.u32 %s174, 1
          %s516 = smul.addr %s515, 8
          %s517 = scalar_lea.vmem [#allocation10], %s516
          %519 = dma.done %s514, 128
        $region76: #{tpu_custom_call.1} parent=71 // pred_fallthru
          _
      $region72: #{tpu_custom_call.1} parent=5 // pred_fallthru
        _
    $region6: #{tpu_custom_call.1} parent=1 // loop_footer
      %s27 = sadd.s32 1, %s23
    $region7: #{tpu_custom_call.1} parent=1 // loop_footer_branch
      %22 = sbr.rel target = $region3
    $region8: #{tpu_custom_call.1} parent=1 // loop_exit
      _
    %520 = vsyncpa [#allocation3], 1
    %s521 = scalar_lea.sflag [#allocation3], 1
    %522 = vsyncpa %s521, 1
    %523 = vsyncpa [#allocation6], 1
    %s524 = scalar_lea.sflag [#allocation6], 1
    %525 = vsyncpa %s524, 1
    %526 = vsyncpa [#allocation9], 1
    %s527 = scalar_lea.sflag [#allocation9], 1
    %528 = vsyncpa %s527, 1
    %529 = vsyncpa [#allocation4], 1
    %s530 = scalar_lea.sflag [#allocation4], 1
    %531 = vsyncpa %s530, 1

</llo_original>
